<compile_context>
chip_gen: v7x
topology: tpu7x:2x2x1
jax: 0.10.0
libtpu: 0.0.40
codegen_flags: <defaults>
</compile_context>

<pallas_src>
from functools import partial

import jax
import jax.numpy as jnp
from jax.experimental import pallas as pl
from jax.experimental.pallas import tpu as pltpu

# Upper-triangle components (0,0),(0,1),(0,2),(1,1),(1,2),(2,2) of the 3x3
# tensor, as flat indices into the merged (3*3) component axis of sig_nn.
_COMPONENTS = (0, 1, 2, 4, 5, 8)


# --------------------------------------------------------------------------- #
# Kernels
# --------------------------------------------------------------------------- #
def _suploss_small_kernel(sf_ref, sn_ref, out_ref, *, scale):
    """Single-step fused kernel for small inputs (everything resident in VMEM).

    sf_ref : VMEM (6, R, L)   target
    sn_ref : VMEM (9, R, L)   prediction (all 9 tensor components)
    out_ref: SMEM (1, 1) f32  final scalar loss
    """
    acc = None
    for c, k in enumerate(_COMPONENTS):
        d = sf_ref[c].astype(jnp.float32) - sn_ref[k].astype(jnp.float32)
        sq = d * d
        acc = sq if acc is None else acc + sq           # VALU adds only
    # Single cross-sublane + cross-lane reduce at the very end.
    out_ref[0, 0] = jnp.sum(acc) * scale


def _suploss_term_kernel(comp_ref, sf_ref, sn_ref, out_ref, acc_ref, *, scale):
    """One (term, row-slab) step of the tiled path.

    comp_ref : SMEM (6,) int32    (used only by the index_maps)
    sf_ref   : VMEM (1, tr, L)    target slab for this term
    sn_ref   : VMEM (1, tr, L)    predicted slab (gathered component, via DMA)
    out_ref  : VMEM (1, 1, 1) f32 per-term scaled partial loss
    acc_ref  : VMEM (ar, L) f32   per-(sublane,lane) partial sums (per core)
    """
    del comp_ref
    r = pl.program_id(1)

    @pl.when(r == 0)
    def _():
        acc_ref[...] = jnp.zeros_like(acc_ref)

    a = sf_ref[0].astype(jnp.float32)                   # (tr, L)
    b = sn_ref[0].astype(jnp.float32)
    d = a - b
    sq = d * d
    tr, lanes = sq.shape
    ar = acc_ref.shape[0]
    # Vreg-aligned partial reduction: groups of `ar` sublanes are added with
    # plain vector adds; no XLU work in the steady-state loop.
    acc_ref[...] += jnp.sum(sq.reshape(tr // ar, ar, lanes), axis=0)

    @pl.when(r == pl.num_programs(1) - 1)
    def _():
        out_ref[...] = jnp.reshape(jnp.sum(acc_ref[...]) * scale, (1, 1, 1))


# --------------------------------------------------------------------------- #
# Wrapper helpers
# --------------------------------------------------------------------------- #
def _vmem_capacity_bytes():
    try:
        cap = getattr(pltpu.get_tpu_info(), "vmem_capacity_bytes", None)
        if cap:
            return int(cap)
    except Exception:
        pass
    return 64 << 20  # conservative (v7x-sized VMEM)


def _lane_dense_factor(n):
    """Factor n as (rows, lanes) with lanes a multiple of 128; prefer rows%8==0."""
    for lanes in (1024, 512, 256, 128):
        if n % lanes == 0 and (n // lanes) % 8 == 0:
            return n // lanes, lanes
    for lanes in (1024, 512, 256, 128):
        if n % lanes == 0:
            return n // lanes, lanes
    return None


def _pick_tr(rows, lanes, itemsize, budget_bytes):
    """Largest row-slab whose double-buffered input blocks fit the budget."""
    if rows % 8 != 0:
        return rows  # block 2nd-to-last dim must be 8-aligned or the full dim

    def step_bytes(tr):
        return 2 * 2 * tr * lanes * itemsize  # 2 inputs x double buffer

    if step_bytes(rows) <= budget_bytes:
        return rows
    best = 8  # always a valid divisor when rows % 8 == 0 (never fall back to full)
    for tr in range(8, rows, 8):
        if rows % tr == 0 and step_bytes(tr) <= budget_bytes:
            best = tr
    return best


# --------------------------------------------------------------------------- #
# Public entry point
# --------------------------------------------------------------------------- #
def suploss(sigfft, sig_nn, *, small_path_max_bytes=None):
    """Equivalent of suploss(sigfft).forward(sig_nn).

    sigfft : (1, 6, D, H, W) float
    sig_nn : (1, 3, 3, D, H, W) float   (only batch index 0 is used, as in the module)
    returns: scalar float32
    """
    assert sigfft.shape[0] == 1 and sigfft.shape[1] == 6
    assert sig_nn.shape[0] == 1 and sig_nn.shape[1] == 3 and sig_nn.shape[2] == 3
    assert sigfft.shape[2:] == sig_nn.shape[3:]
    D, H, W = sigfft.shape[2:]
    n = D * H * W

    # Lane-dense layout: flatten each channel to (rows, lanes) with lanes a
    # multiple of 128 when possible (free, contiguous reshape).
    fac = _lane_dense_factor(n)
    rows, lanes = fac if fac is not None else (D, H * W)

    # Keep the wire dtype (bf16 stays bf16); cast to f32 inside the kernel.
    sf = sigfft.reshape(6, rows, lanes)
    sn = sig_nn.reshape(9, rows, lanes)
    itemsize = max(jnp.dtype(sf.dtype).itemsize, jnp.dtype(sn.dtype).itemsize)

    cap = _vmem_capacity_bytes()
    budget = (24 << 20) if cap >= (96 << 20) else (16 << 20)
    vmem_limit = int(max(min(cap - (16 << 20), budget + (16 << 20)), 16 << 20))

    # All 6 per-term means are over the same element count (D*H*W), so a single
    # 1/n scale is exact; the reference's 1e-10 factor is folded in here.
    scale = float(1e-10) / float(n)

    if small_path_max_bytes is None:
        small_path_max_bytes = budget // 2
    total_bytes = (6 + 9) * n * itemsize

    if total_bytes <= small_path_max_bytes:
        # Fast path: one grid step, whole problem in VMEM. Removes the per-step
        # (~0.35 us) and per-DMA overhead that dominates small shapes.
        out = pl.pallas_call(
            partial(_suploss_small_kernel, scale=scale),
            out_shape=jax.ShapeDtypeStruct((1, 1), jnp.float32),
            grid=(1,),
            in_specs=[
                pl.BlockSpec((6, rows, lanes), lambda i: (0, 0, 0)),
                pl.BlockSpec((9, rows, lanes), lambda i: (0, 0, 0)),
            ],
            out_specs=pl.BlockSpec(memory_space=pltpu.MemorySpace.SMEM),
            compiler_params=pltpu.CompilerParams(
                dimension_semantics=("arbitrary",),
                vmem_limit_bytes=vmem_limit),
        )(sf, sn)
        return out[0, 0]

    # Tiled path: grid = (6 terms, row-slabs). Only the 6 needed sig_nn
    # components are DMA'd, selected through a scalar-prefetched index table.
    comp = jnp.array(_COMPONENTS, dtype=jnp.int32)
    tr = _pick_tr(rows, lanes, itemsize, budget)
    nr = rows // tr
    acc_rows = 8 if tr % 8 == 0 else tr

    grid_spec = pltpu.PrefetchScalarGridSpec(
        num_scalar_prefetch=1,
        grid=(6, nr),
        in_specs=[
            # target: channel t, row-slab r
            pl.BlockSpec((1, tr, lanes), lambda t, r, comp_ref: (t, r, 0)),
            # prediction: only the needed upper-triangle component (SMEM table)
            pl.BlockSpec((1, tr, lanes),
                         lambda t, r, comp_ref: (comp_ref[t], r, 0)),
        ],
        # per-term partial losses -> term axis can run in parallel (megacore)
        out_specs=pl.BlockSpec((1, 1, 1), lambda t, r, comp_ref: (t, 0, 0)),
        scratch_shapes=[pltpu.VMEM((acc_rows, lanes), jnp.float32)],
    )

    out = pl.pallas_call(
        partial(_suploss_term_kernel, scale=scale),
        out_shape=jax.ShapeDtypeStruct((6, 1, 1), jnp.float32),
        grid_spec=grid_spec,
        compiler_params=pltpu.CompilerParams(
            dimension_semantics=("parallel", "arbitrary"),
            vmem_limit_bytes=vmem_limit),
    )(comp, sf, sn)
    return jnp.sum(out)


# --------------------------------------------------------------------------- #
# Reference & test
# --------------------------------------------------------------------------- #
def _reference(sigfft, sig_nn):
    """Plain-JAX transcription of the PyTorch forward (per-term means)."""
    idx = [(0, 0), (0, 1), (0, 2), (1, 1), (1, 2), (2, 2)]
    total = jnp.float32(0.0)
    for c, (a, b) in enumerate(idx):
        total = total + jnp.mean(jnp.square(sigfft[0, c] - sig_nn[0, a, b]))
    return jnp.float32(1e-10) * total


if __name__ == "__main__":
    key = jax.random.PRNGKey(0)
    k1, k2 = jax.random.split(key)
    D, H, W = 16, 16, 16
    # Stored target (module __init__ arg) and predicted symmetric stress field.
    sigfft = jax.random.normal(k1, (1, 6, D, H, W), dtype=jnp.float32)
    sig_nn = jax.random.normal(k2, (1, 3, 3, D, H, W), dtype=jnp.float32)

    ref = _reference(sigfft, sig_nn)

    # Fast (single-step) path -- the one small shapes take by default.
    out_small = jax.block_until_ready(suploss(sigfft, sig_nn))
    assert out_small.shape == (), out_small.shape
    assert jnp.allclose(out_small, ref, rtol=1e-4, atol=1e-15), (out_small, ref)

    # Tiled / scalar-prefetch / megacore path (forced so it is exercised here).
    out_tiled = jax.block_until_ready(
        suploss(sigfft, sig_nn, small_path_max_bytes=0))
    assert out_tiled.shape == (), out_tiled.shape
    assert jnp.allclose(out_tiled, ref, rtol=1e-4, atol=1e-15), (out_tiled, ref)

    print("KERNEL_OK")
</pallas_src>

<mosaic_0001>
module attributes {stable_mosaic.version = 11 : i64} {
  func.func @_suploss_small_kernel(%arg0: i32, %arg1: memref<6x8x512xf32, #tpu.memory_space<vmem>>, %arg2: memref<9x8x512xf32, #tpu.memory_space<vmem>>, %arg3: memref<1x1xf32, #tpu.memory_space<smem>>) attributes {dimension_semantics = [#tpu.dimension_semantics<arbitrary>], iteration_bounds = array<i64: 1>, scalar_prefetch = 0 : i64, scratch_operands = 0 : i64, tpu.core_type = #tpu.core_type<tc>, window_params = [{pipeline_mode = #tpu.pipeline_mode<synchronous>, transform_indices = @transform_0, window_bounds = array<i64: 6, 8, 512>}, {pipeline_mode = #tpu.pipeline_mode<synchronous>, transform_indices = @transform_1, window_bounds = array<i64: 9, 8, 512>}, {transform_indices = @transform_2, window_bounds = array<i64: 1, 1>}]} {
    %c0 = arith.constant 0 : index
    %c0_0 = arith.constant 0 : index
    %c0_1 = arith.constant 0 : index
    %0 = vector.load %arg1[%c0, %c0_0, %c0_1] : memref<6x8x512xf32, #tpu.memory_space<vmem>>, vector<1x8x512xf32>
    %1 = vector.shape_cast %0 : vector<1x8x512xf32> to vector<8x512xf32>
    %c0_2 = arith.constant 0 : index
    %c0_3 = arith.constant 0 : index
    %c0_4 = arith.constant 0 : index
    %2 = vector.load %arg2[%c0_2, %c0_3, %c0_4] : memref<9x8x512xf32, #tpu.memory_space<vmem>>, vector<1x8x512xf32>
    %3 = vector.shape_cast %2 : vector<1x8x512xf32> to vector<8x512xf32>
    %4 = arith.subf %1, %3 : vector<8x512xf32>
    %5 = arith.mulf %4, %4 : vector<8x512xf32>
    %c1 = arith.constant 1 : index
    %c0_5 = arith.constant 0 : index
    %c0_6 = arith.constant 0 : index
    %6 = vector.load %arg1[%c1, %c0_5, %c0_6] : memref<6x8x512xf32, #tpu.memory_space<vmem>>, vector<1x8x512xf32>
    %7 = vector.shape_cast %6 : vector<1x8x512xf32> to vector<8x512xf32>
    %c1_7 = arith.constant 1 : index
    %c0_8 = arith.constant 0 : index
    %c0_9 = arith.constant 0 : index
    %8 = vector.load %arg2[%c1_7, %c0_8, %c0_9] : memref<9x8x512xf32, #tpu.memory_space<vmem>>, vector<1x8x512xf32>
    %9 = vector.shape_cast %8 : vector<1x8x512xf32> to vector<8x512xf32>
    %10 = arith.subf %7, %9 : vector<8x512xf32>
    %11 = arith.mulf %10, %10 : vector<8x512xf32>
    %12 = arith.addf %5, %11 : vector<8x512xf32>
    %c2 = arith.constant 2 : index
    %c0_10 = arith.constant 0 : index
    %c0_11 = arith.constant 0 : index
    %13 = vector.load %arg1[%c2, %c0_10, %c0_11] : memref<6x8x512xf32, #tpu.memory_space<vmem>>, vector<1x8x512xf32>
    %14 = vector.shape_cast %13 : vector<1x8x512xf32> to vector<8x512xf32>
    %c2_12 = arith.constant 2 : index
    %c0_13 = arith.constant 0 : index
    %c0_14 = arith.constant 0 : index
    %15 = vector.load %arg2[%c2_12, %c0_13, %c0_14] : memref<9x8x512xf32, #tpu.memory_space<vmem>>, vector<1x8x512xf32>
    %16 = vector.shape_cast %15 : vector<1x8x512xf32> to vector<8x512xf32>
    %17 = arith.subf %14, %16 : vector<8x512xf32>
    %18 = arith.mulf %17, %17 : vector<8x512xf32>
    %19 = arith.addf %12, %18 : vector<8x512xf32>
    %c3 = arith.constant 3 : index
    %c0_15 = arith.constant 0 : index
    %c0_16 = arith.constant 0 : index
    %20 = vector.load %arg1[%c3, %c0_15, %c0_16] : memref<6x8x512xf32, #tpu.memory_space<vmem>>, vector<1x8x512xf32>
    %21 = vector.shape_cast %20 : vector<1x8x512xf32> to vector<8x512xf32>
    %c4 = arith.constant 4 : index
    %c0_17 = arith.constant 0 : index
    %c0_18 = arith.constant 0 : index
    %22 = vector.load %arg2[%c4, %c0_17, %c0_18] : memref<9x8x512xf32, #tpu.memory_space<vmem>>, vector<1x8x512xf32>
    %23 = vector.shape_cast %22 : vector<1x8x512xf32> to vector<8x512xf32>
    %24 = arith.subf %21, %23 : vector<8x512xf32>
    %25 = arith.mulf %24, %24 : vector<8x512xf32>
    %26 = arith.addf %19, %25 : vector<8x512xf32>
    %c4_19 = arith.constant 4 : index
    %c0_20 = arith.constant 0 : index
    %c0_21 = arith.constant 0 : index
    %27 = vector.load %arg1[%c4_19, %c0_20, %c0_21] : memref<6x8x512xf32, #tpu.memory_space<vmem>>, vector<1x8x512xf32>
    %28 = vector.shape_cast %27 : vector<1x8x512xf32> to vector<8x512xf32>
    %c5 = arith.constant 5 : index
    %c0_22 = arith.constant 0 : index
    %c0_23 = arith.constant 0 : index
    %29 = vector.load %arg2[%c5, %c0_22, %c0_23] : memref<9x8x512xf32, #tpu.memory_space<vmem>>, vector<1x8x512xf32>
    %30 = vector.shape_cast %29 : vector<1x8x512xf32> to vector<8x512xf32>
    %31 = arith.subf %28, %30 : vector<8x512xf32>
    %32 = arith.mulf %31, %31 : vector<8x512xf32>
    %33 = arith.addf %26, %32 : vector<8x512xf32>
    %c5_24 = arith.constant 5 : index
    %c0_25 = arith.constant 0 : index
    %c0_26 = arith.constant 0 : index
    %34 = vector.load %arg1[%c5_24, %c0_25, %c0_26] : memref<6x8x512xf32, #tpu.memory_space<vmem>>, vector<1x8x512xf32>
    %35 = vector.shape_cast %34 : vector<1x8x512xf32> to vector<8x512xf32>
    %c8 = arith.constant 8 : index
    %c0_27 = arith.constant 0 : index
    %c0_28 = arith.constant 0 : index
    %36 = vector.load %arg2[%c8, %c0_27, %c0_28] : memref<9x8x512xf32, #tpu.memory_space<vmem>>, vector<1x8x512xf32>
    %37 = vector.shape_cast %36 : vector<1x8x512xf32> to vector<8x512xf32>
    %38 = arith.subf %35, %37 : vector<8x512xf32>
    %39 = arith.mulf %38, %38 : vector<8x512xf32>
    %40 = arith.addf %33, %39 : vector<8x512xf32>
    %41 = vector.shape_cast %40 : vector<8x512xf32> to vector<1x8x512xf32>
    %cst = arith.constant dense<0.000000e+00> : vector<1xf32>
    %42 = vector.multi_reduction <add>, %41, %cst [1, 2] : vector<1x8x512xf32> to vector<1xf32>
    %43 = vector.shape_cast %42 : vector<1xf32> to vector<1x1x1xf32>
    %44 = vector.extract %43[0, 0, 0] : f32 from vector<1x1x1xf32>
    %cst_29 = arith.constant 2.44140628E-14 : f32
    %45 = arith.mulf %44, %cst_29 : f32
    %c0_30 = arith.constant 0 : index
    %c0_31 = arith.constant 0 : index
    %46 = memref.load %arg3[%c0_30, %c0_31] : memref<1x1xf32, #tpu.memory_space<smem>>
    memref.store %45, %arg3[%c0_30, %c0_31] : memref<1x1xf32, #tpu.memory_space<smem>>
    return
  }
  func.func @transform_0(%arg0: i32) -> (i32, i32, i32) {
    %c0_i32 = arith.constant 0 : i32
    %c0_i32_0 = arith.constant 0 : i32
    %c0_i32_1 = arith.constant 0 : i32
    %c0_i32_2 = arith.constant 0 : i32
    return %c0_i32, %c0_i32_0, %c0_i32_1 : i32, i32, i32
  }
  func.func @transform_1(%arg0: i32) -> (i32, i32, i32) {
    %c0_i32 = arith.constant 0 : i32
    %c0_i32_0 = arith.constant 0 : i32
    %c0_i32_1 = arith.constant 0 : i32
    %c0_i32_2 = arith.constant 0 : i32
    return %c0_i32, %c0_i32_0, %c0_i32_1 : i32, i32, i32
  }
  func.func @transform_2(%arg0: i32) -> (i32, i32) {
    %c0_i32 = arith.constant 0 : i32
    %c0_i32_0 = arith.constant 0 : i32
    %c0_i32_1 = arith.constant 0 : i32
    return %c0_i32, %c0_i32_0 : i32, i32
  }
}

</mosaic_0001>

<llo_original>
// kernel: tpu_custom_call.1
$region0: #{tpu_custom_call.1}
  #allocation0 [shape = 'u32[]', space=smem, size = 0x4, offset = 0x4, fixed_abs, tag = 'smem constant byte address 0x4 - core index']
  #allocation1 [shape = 'u32[144,128]{1,0:T(1,128)}', space=vmem, size = 0x12000, scoped, tag = 'internal scratch']
  %s0 = inlined_call_operand.hbm [shape: f32[6,8,512], index: 0, kind: input, shape index: {}]
  %s1 = inlined_call_operand.hbm [shape: f32[9,8,512], index: 1, kind: input, shape index: {}]
  %s2 = inlined_call_operand.hbm [shape: f32[1,1], index: 2, kind: output, shape index: {}]
  %s3 = sld [smem:[#allocation0]]
  $region26: #{tpu_custom_call.1} parent=0
    _
  %s5 = ssub.s32 1, %s3
  %s6 = scalar_select 0, %s5, %s3
  $region1: #{tpu_custom_call.1} parent=0
    #allocation2 [shape = 'u8[98304]{0}', space=vmem, size = 0x18000, scoped, tag = 'input window, operand 0, single buffered']
    #allocation3 [shape = 's32[1]{0}', space=sflag, size = 0x4, scoped, tag = 'scoped memory for tpu_custom_call.1']
    #allocation4 [shape = 's32[1]{0}', space=sflag, size = 0x4, scoped, tag = 'scoped memory for tpu_custom_call.1']
    #allocation5 [shape = 'u8[147456]{0}', space=vmem, size = 0x24000, scoped, tag = 'input window, operand 1, single buffered']
    #allocation6 [shape = 's32[1]{0}', space=sflag, size = 0x4, scoped, tag = 'scoped memory for tpu_custom_call.1']
    #allocation7 [shape = 'u8[512]{0}', space=smem, size = 0x200, scoped, tag = 'output window, operand 0, single buffered']
    %7 = vsyncpa [#allocation3], 0
    %8 = vsyncpa [#allocation6], 0
    %9 = vsyncpa [#allocation4], 0
    // Predicated region
    $region2: #{tpu_custom_call.1} parent=1 // pred_check
      _
    $region3: #{tpu_custom_call.1} parent=1 // pred_check_branch
      %11 = sbr.rel (0) target = $region5
    $region4: #{tpu_custom_call.1} parent=1 // pred_region
      %s13 = ssub.s32 3072, 3072
      %14 = vsyncadd [#allocation3], %s13
      %s15 = sshll.u32 [#allocation2], 4
      %s16 = int_to_ptr.vmem [resolvable:$true] %s15
      %21 = dma.hbm_to_vmem [thread:$0]  %s0, 3072, %s16, [#allocation3], 512, 512, 32
    $region5: #{tpu_custom_call.1} parent=1 // pred_fallthru
      _
    // Predicated region
    $region6: #{tpu_custom_call.1} parent=1 // pred_check
      _
    $region7: #{tpu_custom_call.1} parent=1 // pred_check_branch
      %23 = sbr.rel (0) target = $region9
    $region8: #{tpu_custom_call.1} parent=1 // pred_region
      %s25 = ssub.s32 4608, 4608
      %26 = vsyncadd [#allocation6], %s25
      %s27 = sshll.u32 [#allocation5], 4
      %s28 = int_to_ptr.vmem [resolvable:$true] %s27
      %33 = dma.hbm_to_vmem [thread:$0]  %s1, 4608, %s28, [#allocation6], 512, 512, 32
    $region9: #{tpu_custom_call.1} parent=1 // pred_fallthru
      _
    // Predicated region
    $region10: #{tpu_custom_call.1} parent=1 // pred_check
      _
    $region11: #{tpu_custom_call.1} parent=1 // pred_check_branch
      %35 = sbr.rel (0) target = $region13
    $region12: #{tpu_custom_call.1} parent=1 // pred_region
      %36 = dma.done [#allocation3], 3072
    $region13: #{tpu_custom_call.1} parent=1 // pred_fallthru
      _
    // Predicated region
    $region14: #{tpu_custom_call.1} parent=1 // pred_check
      _
    $region15: #{tpu_custom_call.1} parent=1 // pred_check_branch
      %38 = sbr.rel (0) target = $region17
    $region16: #{tpu_custom_call.1} parent=1 // pred_region
      %39 = dma.done [#allocation6], 4608
    $region17: #{tpu_custom_call.1} parent=1 // pred_fallthru
      _
    %v40 = vld [vmem:[#allocation2] sm:$0xff]
    %v41 = vld [vmem:[#allocation2 + $0x8] sm:$0xff]
    %v42 = vld [vmem:[#allocation2 + $0x10] sm:$0xff]
    %v43 = vld [vmem:[#allocation2 + $0x18] sm:$0xff]
    %v44 = vld [vmem:[#allocation5] sm:$0xff]
    %v45 = vld [vmem:[#allocation5 + $0x8] sm:$0xff]
    %v46 = vld [vmem:[#allocation5 + $0x10] sm:$0xff]
    %v47 = vld [vmem:[#allocation5 + $0x18] sm:$0xff]
    %v48 = vsub.f32 %v40, %v44
    %v49 = vsub.f32 %v41, %v45
    %v50 = vsub.f32 %v42, %v46
    %v51 = vsub.f32 %v43, %v47
    %v52 = vmul.f32 %v48, %v48
    %v53 = vmul.f32 %v49, %v49
    %v54 = vmul.f32 %v50, %v50
    %v55 = vmul.f32 %v51, %v51
    %s56 = scalar_lea.vmem [#allocation2], 32
    %v57 = vld [vmem:[%s56] sm:$0xff]
    %v58 = vld [vmem:[%s56 + $0x8] sm:$0xff]
    %v59 = vld [vmem:[%s56 + $0x10] sm:$0xff]
    %v60 = vld [vmem:[%s56 + $0x18] sm:$0xff]
    %s61 = scalar_lea.vmem [#allocation5], 32
    %v62 = vld [vmem:[%s61] sm:$0xff]
    %v63 = vld [vmem:[%s61 + $0x8] sm:$0xff]
    %v64 = vld [vmem:[%s61 + $0x10] sm:$0xff]
    %v65 = vld [vmem:[%s61 + $0x18] sm:$0xff]
    %v66 = vsub.f32 %v57, %v62
    %v67 = vsub.f32 %v58, %v63
    %v68 = vsub.f32 %v59, %v64
    %v69 = vsub.f32 %v60, %v65
    %v70 = vmul.f32 %v66, %v66
    %v71 = vmul.f32 %v67, %v67
    %v72 = vmul.f32 %v68, %v68
    %v73 = vmul.f32 %v69, %v69
    %v74 = vadd.f32 %v52, %v70
    %v75 = vadd.f32 %v53, %v71
    %v76 = vadd.f32 %v54, %v72
    %v77 = vadd.f32 %v55, %v73
    %s78 = scalar_lea.vmem [#allocation2], 64
    %v79 = vld [vmem:[%s78] sm:$0xff]
    %v80 = vld [vmem:[%s78 + $0x8] sm:$0xff]
    %v81 = vld [vmem:[%s78 + $0x10] sm:$0xff]
    %v82 = vld [vmem:[%s78 + $0x18] sm:$0xff]
    %s83 = scalar_lea.vmem [#allocation5], 64
    %v84 = vld [vmem:[%s83] sm:$0xff]
    %v85 = vld [vmem:[%s83 + $0x8] sm:$0xff]
    %v86 = vld [vmem:[%s83 + $0x10] sm:$0xff]
    %v87 = vld [vmem:[%s83 + $0x18] sm:$0xff]
    %v88 = vsub.f32 %v79, %v84
    %v89 = vsub.f32 %v80, %v85
    %v90 = vsub.f32 %v81, %v86
    %v91 = vsub.f32 %v82, %v87
    %v92 = vmul.f32 %v88, %v88
    %v93 = vmul.f32 %v89, %v89
    %v94 = vmul.f32 %v90, %v90
    %v95 = vmul.f32 %v91, %v91
    %v96 = vadd.f32 %v74, %v92
    %v97 = vadd.f32 %v75, %v93
    %v98 = vadd.f32 %v76, %v94
    %v99 = vadd.f32 %v77, %v95
    %s100 = scalar_lea.vmem [#allocation2], 96
    %v101 = vld [vmem:[%s100] sm:$0xff]
    %v102 = vld [vmem:[%s100 + $0x8] sm:$0xff]
    %v103 = vld [vmem:[%s100 + $0x10] sm:$0xff]
    %v104 = vld [vmem:[%s100 + $0x18] sm:$0xff]
    %s105 = scalar_lea.vmem [#allocation5], 128
    %v106 = vld [vmem:[%s105] sm:$0xff]
    %v107 = vld [vmem:[%s105 + $0x8] sm:$0xff]
    %v108 = vld [vmem:[%s105 + $0x10] sm:$0xff]
    %v109 = vld [vmem:[%s105 + $0x18] sm:$0xff]
    %v110 = vsub.f32 %v101, %v106
    %v111 = vsub.f32 %v102, %v107
    %v112 = vsub.f32 %v103, %v108
    %v113 = vsub.f32 %v104, %v109
    %v114 = vmul.f32 %v110, %v110
    %v115 = vmul.f32 %v111, %v111
    %v116 = vmul.f32 %v112, %v112
    %v117 = vmul.f32 %v113, %v113
    %v118 = vadd.f32 %v96, %v114
    %v119 = vadd.f32 %v97, %v115
    %v120 = vadd.f32 %v98, %v116
    %v121 = vadd.f32 %v99, %v117
    %s122 = scalar_lea.vmem [#allocation2], 128
    %v123 = vld [vmem:[%s122] sm:$0xff]
    %v124 = vld [vmem:[%s122 + $0x8] sm:$0xff]
    %v125 = vld [vmem:[%s122 + $0x10] sm:$0xff]
    %v126 = vld [vmem:[%s122 + $0x18] sm:$0xff]
    %s127 = scalar_lea.vmem [#allocation5], 160
    %v128 = vld [vmem:[%s127] sm:$0xff]
    %v129 = vld [vmem:[%s127 + $0x8] sm:$0xff]
    %v130 = vld [vmem:[%s127 + $0x10] sm:$0xff]
    %v131 = vld [vmem:[%s127 + $0x18] sm:$0xff]
    %v132 = vsub.f32 %v123, %v128
    %v133 = vsub.f32 %v124, %v129
    %v134 = vsub.f32 %v125, %v130
    %v135 = vsub.f32 %v126, %v131
    %v136 = vmul.f32 %v132, %v132
    %v137 = vmul.f32 %v133, %v133
    %v138 = vmul.f32 %v134, %v134
    %v139 = vmul.f32 %v135, %v135
    %v140 = vadd.f32 %v118, %v136
    %v141 = vadd.f32 %v119, %v137
    %v142 = vadd.f32 %v120, %v138
    %v143 = vadd.f32 %v121, %v139
    %s144 = scalar_lea.vmem [#allocation2], 160
    %v145 = vld [vmem:[%s144] sm:$0xff]
    %v146 = vld [vmem:[%s144 + $0x8] sm:$0xff]
    %v147 = vld [vmem:[%s144 + $0x10] sm:$0xff]
    %v148 = vld [vmem:[%s144 + $0x18] sm:$0xff]
    %s149 = scalar_lea.vmem [#allocation5], 256
    %v150 = vld [vmem:[%s149] sm:$0xff]
    %v151 = vld [vmem:[%s149 + $0x8] sm:$0xff]
    %v152 = vld [vmem:[%s149 + $0x10] sm:$0xff]
    %v153 = vld [vmem:[%s149 + $0x18] sm:$0xff]
    %v154 = vsub.f32 %v145, %v150
    %v155 = vsub.f32 %v146, %v151
    %v156 = vsub.f32 %v147, %v152
    %v157 = vsub.f32 %v148, %v153
    %v158 = vmul.f32 %v154, %v154
    %v159 = vmul.f32 %v155, %v155
    %v160 = vmul.f32 %v156, %v156
    %v161 = vmul.f32 %v157, %v157
    %v162 = vadd.f32 %v140, %v158
    %v163 = vadd.f32 %v141, %v159
    %v164 = vadd.f32 %v142, %v160
    %v165 = vadd.f32 %v143, %v161
    %v166 = vadd.f32 %v162, %v163
    %v167 = vadd.f32 %v166, %v164
    %v168 = vadd.f32 %v167, %v165
    %169 = vadd.xlane.f32.xlu0 %v168
    %v170 = vpop.xlane.xlu0 %169
    %v171 = vrot.slane %v170, 4
    %v172 = vadd.f32 %v170, %v171
    %v173 = vrot.slane %v172, 2
    %v174 = vadd.f32 %v172, %v173
    %v175 = vrot.slane %v174, 1
    %v176 = vadd.f32 %v174, %v175
    %s177 = vtos %v176
    %s178 = smul.f32 %s177, 2.4414063e-14
    %s179 = scalar_lea.smem [#allocation7], 0
    %180 = sst [smem:[%s179]] %s178
    // Predicated region
    $region18: #{tpu_custom_call.1} parent=1 // pred_check
      _
    $region19: #{tpu_custom_call.1} parent=1 // pred_check_branch
      %182 = sbr.rel (0) target = $region21
    $region20: #{tpu_custom_call.1} parent=1 // pred_region
      %s184 = ssub.s32 16, 16
      %185 = vsyncadd [#allocation4], %s184
      %188 = dma.smem_to_hbm [#allocation7], 16, %s2, [#allocation4]
    $region21: #{tpu_custom_call.1} parent=1 // pred_fallthru
      _
    // Predicated region
    $region22: #{tpu_custom_call.1} parent=1 // pred_check
      _
    $region23: #{tpu_custom_call.1} parent=1 // pred_check_branch
      %190 = sbr.rel (0) target = $region25
    $region24: #{tpu_custom_call.1} parent=1 // pred_region
      %191 = dma.done [#allocation4], 16
    $region25: #{tpu_custom_call.1} parent=1 // pred_fallthru
      _
    %192 = sfence
    %193 = vsyncpa [#allocation3], 1
    %194 = vsyncpa [#allocation6], 1
    %195 = vsyncpa [#allocation4], 1

</llo_original>
